<compile_context>
chip_gen: v7x
topology: tpu7x:2x2x1
jax: 0.10.0
libtpu: 0.0.40
codegen_flags: <defaults>
</compile_context>

<pallas_src>
import functools

import jax
import jax.numpy as jnp
from jax.experimental import pallas as pl
from jax.experimental.pallas import tpu as pltpu

_LANES = 128
_TARGET_ROWS = 1024  # folded rows per block: 1024 * 128 * 4B = 512 KiB per stream


# ----------------------------------------------------------------------------- kernels
def _focal_terms(x, t, gamma, alpha):
    """Element-wise sigmoid focal loss. x: f32 logits, t: bool one-hot indicator."""
    # z = x * (1 - 2t): then pt = sigmoid(z) and BCE-with-logits = softplus(z).
    z = jnp.where(t, -x, x)
    e = jnp.exp(-jnp.abs(z))                       # shared by softplus and sigmoid
    one_plus_e = 1.0 + e
    bce = jnp.maximum(z, 0.0) + jnp.log(one_plus_e)          # softplus(z)
    pt = jnp.where(z >= 0.0, 1.0, e) * pl.reciprocal(one_plus_e)  # sigmoid(z)
    if gamma == 2.0:
        mod = pt * pt
    elif gamma == 1.0:
        mod = pt
    else:
        mod = jnp.power(pt, jnp.float32(gamma))
    alpha_w = jnp.where(t, jnp.float32(alpha), jnp.float32(1.0 - alpha))
    return alpha_w * mod * bce


def _one_hot_from_hot_lanes(hot_ref, shape):
    """Rebuild the folded one-hot indicator: t[r, l] = any_j (l == hot[r, j])."""
    lane = jax.lax.broadcasted_iota(jnp.int32, shape, 1)
    t = lane == hot_ref[:, 0:1]
    for j in range(1, hot_ref.shape[1]):           # S = 128 // C unrolled compares
        t = jnp.logical_or(t, lane == hot_ref[:, j:j + 1])
    return t


def _folded_sum_kernel(pred_ref, hot_ref, partial_ref, *, gamma, alpha, valid_rows):
    x = pred_ref[...].astype(jnp.float32)          # (tile_r, 128), lane-dense
    t = _one_hot_from_hot_lanes(hot_ref, x.shape)
    loss = _focal_terms(x, t, gamma, alpha)
    if valid_rows is not None:                     # mask rows of a ragged last block
        row = (pl.program_id(0) * x.shape[0]
               + jax.lax.broadcasted_iota(jnp.int32, x.shape, 0))
        loss = jnp.where(row < valid_rows, loss, 0.0)
    partial_ref[0] = jnp.sum(loss, axis=0, keepdims=True)     # (1, 128) partial


def _folded_elem_kernel(pred_ref, hot_ref, out_ref, *, gamma, alpha):
    x = pred_ref[...].astype(jnp.float32)
    t = _one_hot_from_hot_lanes(hot_ref, x.shape)
    out_ref[...] = _focal_terms(x, t, gamma, alpha).astype(out_ref.dtype)


def _rows_elem_kernel(pred_ref, label_ref, out_ref, *, gamma, alpha):
    # Fallback layout (lanes = classes) when C does not pack evenly into 128 lanes.
    x = pred_ref[...].astype(jnp.float32)          # (tile_n, C)
    cls = jax.lax.broadcasted_iota(jnp.int32, x.shape, 1)
    t = label_ref[...] == cls                      # label == C matches no column
    out_ref[...] = _focal_terms(x, t, gamma, alpha).astype(out_ref.dtype)


# ----------------------------------------------------------------------------- wrappers
def _pick_tile(rows, target):
    """Largest block <= target that divides `rows` (multiple of 8), else a ragged grid."""
    if rows <= target:
        return rows, 1, False
    for t in range(target - target % 8, 7, -8):
        if rows % t == 0:
            return t, rows // t, False
    return target, pl.cdiv(rows, target), True


def _focal_folded(pred, target, gamma, alpha, want_elementwise, tile_rows):
    N, C = pred.shape
    S = _LANES // C                                # samples packed per folded row
    R = N // S                                     # folded rows
    pred_f = pred.reshape(R, _LANES)               # free: row-major contiguous reshape
    pos = (jnp.arange(N, dtype=jnp.int32) % S) * C
    hot = jnp.where(target < C, pos + target, -1).astype(jnp.int32).reshape(R, S)

    if tile_rows is None:
        tile_r, grid_r, ragged = _pick_tile(R, _TARGET_ROWS)
    else:
        tile_r = min(int(tile_rows), R)
        if tile_r < R:
            tile_r = max(8, (tile_r // 8) * 8)
        grid_r = pl.cdiv(R, tile_r)
        ragged = grid_r * tile_r != R

    params = pltpu.CompilerParams(dimension_semantics=("parallel",))
    in_specs = [
        pl.BlockSpec((tile_r, _LANES), lambda i: (i, 0)),
        pl.BlockSpec((tile_r, S), lambda i: (i, 0)),
    ]

    if want_elementwise:
        kernel = functools.partial(_folded_elem_kernel, gamma=gamma, alpha=alpha)
        out = pl.pallas_call(
            kernel,
            out_shape=jax.ShapeDtypeStruct((R, _LANES), pred.dtype),
            grid=(grid_r,),
            in_specs=in_specs,
            out_specs=pl.BlockSpec((tile_r, _LANES), lambda i: (i, 0)),
            compiler_params=params,
        )(pred_f, hot)
        return out.reshape(N, C)

    kernel = functools.partial(_folded_sum_kernel, gamma=gamma, alpha=alpha,
                               valid_rows=R if ragged else None)
    partials = pl.pallas_call(
        kernel,
        out_shape=jax.ShapeDtypeStruct((grid_r, 1, _LANES), jnp.float32),
        grid=(grid_r,),
        in_specs=in_specs,
        out_specs=pl.BlockSpec((1, 1, _LANES), lambda i: (i, 0, 0)),
        compiler_params=params,
    )(pred_f, hot)
    return jnp.sum(partials)


def _focal_rows(pred, target, gamma, alpha, tile_n):
    N, C = pred.shape
    labels = target.reshape(N, 1)
    if tile_n is None:
        tile_n, grid_n, _ = _pick_tile(N, 1024)
    else:
        tile_n = min(int(tile_n), N)
        if tile_n < N:
            tile_n = max(8, (tile_n // 8) * 8)
        grid_n = pl.cdiv(N, tile_n)
    kernel = functools.partial(_rows_elem_kernel, gamma=gamma, alpha=alpha)
    return pl.pallas_call(
        kernel,
        out_shape=jax.ShapeDtypeStruct((N, C), pred.dtype),
        grid=(grid_n,),
        in_specs=[pl.BlockSpec((tile_n, C), lambda i: (i, 0)),
                  pl.BlockSpec((tile_n, 1), lambda i: (i, 0))],
        out_specs=pl.BlockSpec((tile_n, C), lambda i: (i, 0)),
        compiler_params=pltpu.CompilerParams(dimension_semantics=("parallel",)),
    )(pred, labels)


def focal_loss(pred, target, weight=None, *, gamma=2.0, alpha=0.25,
               reduction="mean", avg_factor=None, loss_weight=1.0, tile_rows=None):
    """FocalLoss.forward with use_sigmoid=True.

    pred: (N, C) logits (f32 or bf16). target: (N,) int labels in [0, C], where
    label == C is the background class (all-zero one-hot row).
    """
    assert reduction in ("none", "mean", "sum")
    if weight is not None:
        # TODO(synk): sample-wise `weight` rescaling is not implemented in the kernel path.
        raise NotImplementedError("sample-wise weight is not supported")

    N, C = pred.shape
    target = target.astype(jnp.int32)

    foldable = (C <= _LANES and _LANES % C == 0 and (_LANES // C) <= 16
                and N % (_LANES // C) == 0)

    if reduction == "none":
        assert avg_factor is None
        if foldable:
            loss = _focal_folded(pred, target, gamma, alpha, True, tile_rows)
        else:
            loss = _focal_rows(pred, target, gamma, alpha, tile_rows)
        return loss_weight * loss

    if foldable:
        total = _focal_folded(pred, target, gamma, alpha, False, tile_rows)
    else:
        total = jnp.sum(
            _focal_rows(pred, target, gamma, alpha, tile_rows).astype(jnp.float32))

    if avg_factor is not None:
        assert reduction == "mean", "avg_factor only supported with reduction='mean'"
        return loss_weight * total / avg_factor
    if reduction == "sum":
        return loss_weight * total
    return loss_weight * total / (N * C)      # torch loss.mean() over all N*C elements


class FocalLoss:
    """Thin functional mirror of the PyTorch module (use_sigmoid=True only)."""

    def __init__(self, use_sigmoid=True, gamma=2.0, alpha=0.25,
                 reduction="mean", loss_weight=1.0):
        assert use_sigmoid is True, "Only sigmoid focal loss supported now."
        self.gamma, self.alpha = gamma, alpha
        self.reduction, self.loss_weight = reduction, loss_weight

    def __call__(self, pred, target, weight=None, avg_factor=None,
                 reduction_override=None):
        assert reduction_override in (None, "none", "mean", "sum")
        reduction = reduction_override if reduction_override else self.reduction
        return focal_loss(pred, target, weight, gamma=self.gamma, alpha=self.alpha,
                          reduction=reduction, avg_factor=avg_factor,
                          loss_weight=self.loss_weight)


# ----------------------------------------------------------------------------- test
if __name__ == "__main__":
    key = jax.random.PRNGKey(0)
    k1, k2 = jax.random.split(key)

    N, C = 64, 16      # 64 predictions, 16 foreground classes (+1 background label)
    pred = jax.random.normal(k1, (N, C), dtype=jnp.float32) * 2.0
    target = jax.random.randint(k2, (N,), 0, C + 1, dtype=jnp.int32)

    loss_fn = FocalLoss(gamma=2.0, alpha=0.25, reduction="mean", loss_weight=1.0)
    loss_mean = loss_fn(pred, target)
    loss_sum = loss_fn(pred, target, reduction_override="sum")
    loss_none = loss_fn(pred, target, reduction_override="none")
    jax.block_until_ready((loss_mean, loss_sum, loss_none))

    # Pure-JAX reference (mirrors F.one_hot(target, C+1)[:, :C] + py_sigmoid_focal_loss).
    t = jax.nn.one_hot(target, C + 1, dtype=jnp.float32)[:, :C]
    p = jax.nn.sigmoid(pred)
    pt = (1.0 - p) * t + p * (1.0 - t)
    fw = (0.25 * t + 0.75 * (1.0 - t)) * pt * pt
    bce = jnp.maximum(pred, 0.0) - pred * t + jnp.log1p(jnp.exp(-jnp.abs(pred)))
    ref_elem = bce * fw

    assert jnp.allclose(loss_none, ref_elem, rtol=1e-5, atol=1e-6), "none mismatch"
    assert jnp.allclose(loss_sum, jnp.sum(ref_elem), rtol=1e-5, atol=1e-5), "sum mismatch"
    assert jnp.allclose(loss_mean, jnp.mean(ref_elem), rtol=1e-5, atol=1e-6), "mean mismatch"
    print("KERNEL_OK")
</pallas_src>

<mosaic_0001>
module attributes {stable_mosaic.version = 11 : i64} {
  func.func @_folded_sum_kernel(%arg0: i32, %arg1: memref<8x128xf32, #tpu.memory_space<vmem>>, %arg2: memref<8x8xi32, #tpu.memory_space<vmem>>, %arg3: memref<1x1x128xf32, #tpu.memory_space<vmem>>) attributes {dimension_semantics = [#tpu.dimension_semantics<parallel>], iteration_bounds = array<i64: 1>, scalar_prefetch = 0 : i64, scratch_operands = 0 : i64, tpu.core_type = #tpu.core_type<tc>, window_params = [{transform_indices = @transform_0, window_bounds = array<i64: 8, 128>}, {transform_indices = @transform_1, window_bounds = array<i64: 8, 8>}, {transform_indices = @transform_2, window_bounds = array<i64: 1, 1, 128>}]} {
    %c0 = arith.constant 0 : index
    %c0_0 = arith.constant 0 : index
    %0 = vector.load %arg1[%c0, %c0_0] : memref<8x128xf32, #tpu.memory_space<vmem>>, vector<8x128xf32>
    %1 = tpu.iota {dimensions = array<i32: 1>} : vector<8x128xi32>
    %c0_1 = arith.constant 0 : index
    %c0_2 = arith.constant 0 : index
    %2 = vector.load %arg2[%c0_1, %c0_2] : memref<8x8xi32, #tpu.memory_space<vmem>>, vector<8x1xi32>
    %3 = vector.broadcast %2 : vector<8x1xi32> to vector<8x128xi32>
    %4 = arith.cmpi eq, %1, %3 : vector<8x128xi32>
    %c0_3 = arith.constant 0 : index
    %c1 = arith.constant 1 : index
    %5 = vector.load %arg2[%c0_3, %c1] : memref<8x8xi32, #tpu.memory_space<vmem>>, vector<8x1xi32>
    %6 = vector.broadcast %5 : vector<8x1xi32> to vector<8x128xi32>
    %7 = arith.cmpi eq, %1, %6 : vector<8x128xi32>
    %8 = arith.ori %4, %7 : vector<8x128xi1>
    %c0_4 = arith.constant 0 : index
    %c2 = arith.constant 2 : index
    %9 = vector.load %arg2[%c0_4, %c2] : memref<8x8xi32, #tpu.memory_space<vmem>>, vector<8x1xi32>
    %10 = vector.broadcast %9 : vector<8x1xi32> to vector<8x128xi32>
    %11 = arith.cmpi eq, %1, %10 : vector<8x128xi32>
    %12 = arith.ori %8, %11 : vector<8x128xi1>
    %c0_5 = arith.constant 0 : index
    %c3 = arith.constant 3 : index
    %13 = vector.load %arg2[%c0_5, %c3] : memref<8x8xi32, #tpu.memory_space<vmem>>, vector<8x1xi32>
    %14 = vector.broadcast %13 : vector<8x1xi32> to vector<8x128xi32>
    %15 = arith.cmpi eq, %1, %14 : vector<8x128xi32>
    %16 = arith.ori %12, %15 : vector<8x128xi1>
    %c0_6 = arith.constant 0 : index
    %c4 = arith.constant 4 : index
    %17 = vector.load %arg2[%c0_6, %c4] : memref<8x8xi32, #tpu.memory_space<vmem>>, vector<8x1xi32>
    %18 = vector.broadcast %17 : vector<8x1xi32> to vector<8x128xi32>
    %19 = arith.cmpi eq, %1, %18 : vector<8x128xi32>
    %20 = arith.ori %16, %19 : vector<8x128xi1>
    %c0_7 = arith.constant 0 : index
    %c5 = arith.constant 5 : index
    %21 = vector.load %arg2[%c0_7, %c5] : memref<8x8xi32, #tpu.memory_space<vmem>>, vector<8x1xi32>
    %22 = vector.broadcast %21 : vector<8x1xi32> to vector<8x128xi32>
    %23 = arith.cmpi eq, %1, %22 : vector<8x128xi32>
    %24 = arith.ori %20, %23 : vector<8x128xi1>
    %c0_8 = arith.constant 0 : index
    %c6 = arith.constant 6 : index
    %25 = vector.load %arg2[%c0_8, %c6] : memref<8x8xi32, #tpu.memory_space<vmem>>, vector<8x1xi32>
    %26 = vector.broadcast %25 : vector<8x1xi32> to vector<8x128xi32>
    %27 = arith.cmpi eq, %1, %26 : vector<8x128xi32>
    %28 = arith.ori %24, %27 : vector<8x128xi1>
    %c0_9 = arith.constant 0 : index
    %c7 = arith.constant 7 : index
    %29 = vector.load %arg2[%c0_9, %c7] : memref<8x8xi32, #tpu.memory_space<vmem>>, vector<8x1xi32>
    %30 = vector.broadcast %29 : vector<8x1xi32> to vector<8x128xi32>
    %31 = arith.cmpi eq, %1, %30 : vector<8x128xi32>
    %32 = arith.ori %28, %31 : vector<8x128xi1>
    %cst = arith.constant 0.000000e+00 : f32
    %33 = vector.broadcast %cst : f32 to vector<8x128xf32>
    %34 = arith.subf %33, %0 : vector<8x128xf32>
    %35 = arith.select %32, %34, %0 : vector<8x128xi1>, vector<8x128xf32>
    %36 = math.absf %35 : vector<8x128xf32>
    %cst_10 = arith.constant 0.000000e+00 : f32
    %37 = vector.broadcast %cst_10 : f32 to vector<8x128xf32>
    %38 = arith.subf %37, %36 : vector<8x128xf32>
    %39 = math.exp %38 : vector<8x128xf32>
    %cst_11 = arith.constant 1.000000e+00 : f32
    %40 = vector.broadcast %cst_11 : f32 to vector<8x128xf32>
    %41 = arith.addf %40, %39 : vector<8x128xf32>
    %cst_12 = arith.constant 0.000000e+00 : f32
    %42 = vector.broadcast %cst_12 : f32 to vector<8x128xf32>
    %43 = arith.maximumf %35, %42 : vector<8x128xf32>
    %44 = math.log %41 : vector<8x128xf32>
    %45 = arith.addf %43, %44 : vector<8x128xf32>
    %cst_13 = arith.constant 0.000000e+00 : f32
    %46 = vector.broadcast %cst_13 : f32 to vector<8x128xf32>
    %47 = arith.cmpf oge, %35, %46 : vector<8x128xf32>
    %cst_14 = arith.constant 1.000000e+00 : f32
    %48 = vector.broadcast %cst_14 : f32 to vector<8x128xf32>
    %49 = arith.select %47, %48, %39 : vector<8x128xi1>, vector<8x128xf32>
    %50 = tpu.reciprocal %41 : vector<8x128xf32> -> vector<8x128xf32>
    %51 = arith.mulf %49, %50 : vector<8x128xf32>
    %52 = arith.mulf %51, %51 : vector<8x128xf32>
    %cst_15 = arith.constant 2.500000e-01 : f32
    %cst_16 = arith.constant 7.500000e-01 : f32
    %53 = vector.broadcast %cst_15 : f32 to vector<8x128xf32>
    %54 = vector.broadcast %cst_16 : f32 to vector<8x128xf32>
    %55 = arith.select %32, %53, %54 : vector<8x128xi1>, vector<8x128xf32>
    %56 = arith.mulf %55, %52 : vector<8x128xf32>
    %57 = arith.mulf %56, %45 : vector<8x128xf32>
    %cst_17 = arith.constant dense<0.000000e+00> : vector<128xf32>
    %58 = vector.multi_reduction <add>, %57, %cst_17 [0] : vector<8x128xf32> to vector<128xf32>
    %59 = vector.shape_cast %58 : vector<128xf32> to vector<1x128xf32>
    %c0_18 = arith.constant 0 : index
    %c0_19 = arith.constant 0 : index
    %c0_20 = arith.constant 0 : index
    %60 = vector.load %arg3[%c0_18, %c0_19, %c0_20] : memref<1x1x128xf32, #tpu.memory_space<vmem>>, vector<1x1x128xf32>
    %61 = vector.shape_cast %60 : vector<1x1x128xf32> to vector<1x128xf32>
    %62 = vector.shape_cast %59 : vector<1x128xf32> to vector<1x1x128xf32>
    tpu.vector_store %arg3[%c0_18, %c0_19, %c0_20], %62 {strides = array<i32>} : memref<1x1x128xf32, #tpu.memory_space<vmem>>, vector<1x1x128xf32>,
    return
  }
  func.func @transform_0(%arg0: i32) -> (i32, i32) {
    %c0_i32 = arith.constant 0 : i32
    %c0_i32_0 = arith.constant 0 : i32
    return %arg0, %c0_i32 : i32, i32
  }
  func.func @transform_1(%arg0: i32) -> (i32, i32) {
    %c0_i32 = arith.constant 0 : i32
    %c0_i32_0 = arith.constant 0 : i32
    return %arg0, %c0_i32 : i32, i32
  }
  func.func @transform_2(%arg0: i32) -> (i32, i32, i32) {
    %c0_i32 = arith.constant 0 : i32
    %c0_i32_0 = arith.constant 0 : i32
    %c0_i32_1 = arith.constant 0 : i32
    return %arg0, %c0_i32, %c0_i32_0 : i32, i32, i32
  }
}

</mosaic_0001>

<llo_original>
// kernel: tpu_custom_call.1
$region0: #{tpu_custom_call.1}
  #allocation0 [shape = 'u32[]', space=smem, size = 0x4, offset = 0x4, fixed_abs, tag = 'smem constant byte address 0x4 - core index']
  #allocation1 [shape = 'u32[144,128]{1,0:T(1,128)}', space=vmem, size = 0x12000, scoped, tag = 'internal scratch']
  %s0 = inlined_call_operand.hbm [shape: f32[8,128], index: 0, kind: input, shape index: {}]
  %s1 = inlined_call_operand.hbm [shape: s32[8,8], index: 1, kind: input, shape index: {}]
  %s2 = inlined_call_operand.hbm [shape: f32[1,1,128], index: 2, kind: output, shape index: {}]
  %s3 = sld [smem:[#allocation0]]
  $region26: #{tpu_custom_call.1} parent=0
    _
  %s5 = ssub.s32 1, %s3
  %s6 = scalar_select 0, %s5, %s3
  $region1: #{tpu_custom_call.1} parent=0
    #allocation2 [shape = 'u8[4096]{0}', space=vmem, size = 0x1000, scoped, tag = 'input window, operand 0, single buffered']
    #allocation3 [shape = 's32[1]{0}', space=sflag, size = 0x4, scoped, tag = 'scoped memory for tpu_custom_call.1']
    #allocation4 [shape = 's32[1]{0}', space=sflag, size = 0x4, scoped, tag = 'scoped memory for tpu_custom_call.1']
    #allocation5 [shape = 'u8[4096]{0}', space=vmem, size = 0x1000, scoped, tag = 'input window, operand 1, single buffered']
    #allocation6 [shape = 's32[1]{0}', space=sflag, size = 0x4, scoped, tag = 'scoped memory for tpu_custom_call.1']
    #allocation7 [shape = 'u8[512]{0}', space=vmem, size = 0x400, scoped, tag = 'output window, operand 0, single buffered']
    %7 = vsyncpa [#allocation3], 0
    %8 = vsyncpa [#allocation6], 0
    %9 = vsyncpa [#allocation4], 0
    // Predicated region
    $region2: #{tpu_custom_call.1} parent=1 // pred_check
      _
    $region3: #{tpu_custom_call.1} parent=1 // pred_check_branch
      %11 = sbr.rel (0) target = $region5
    $region4: #{tpu_custom_call.1} parent=1 // pred_region
      %s13 = ssub.s32 128, 128
      %14 = vsyncadd [#allocation3], %s13
      %s16 = sshll.u32 [#allocation2], 4
      %s17 = int_to_ptr.vmem [resolvable:$true] %s16
      %19 = dma.hbm_to_vmem [thread:$0]  %s0, 128, %s17, [#allocation3]
    $region5: #{tpu_custom_call.1} parent=1 // pred_fallthru
      _
    // Predicated region
    $region6: #{tpu_custom_call.1} parent=1 // pred_check
      _
    $region7: #{tpu_custom_call.1} parent=1 // pred_check_branch
      %21 = sbr.rel (0) target = $region9
    $region8: #{tpu_custom_call.1} parent=1 // pred_region
      %s23 = ssub.s32 128, 128
      %24 = vsyncadd [#allocation6], %s23
      %s26 = sshll.u32 [#allocation5], 4
      %s27 = int_to_ptr.vmem [resolvable:$true] %s26
      %29 = dma.hbm_to_vmem [thread:$0]  %s1, 128, %s27, [#allocation6]
    $region9: #{tpu_custom_call.1} parent=1 // pred_fallthru
      _
    // Predicated region
    $region10: #{tpu_custom_call.1} parent=1 // pred_check
      _
    $region11: #{tpu_custom_call.1} parent=1 // pred_check_branch
      %31 = sbr.rel (0) target = $region13
    $region12: #{tpu_custom_call.1} parent=1 // pred_region
      %32 = dma.done [#allocation3], 128
    $region13: #{tpu_custom_call.1} parent=1 // pred_fallthru
      _
    // Predicated region
    $region14: #{tpu_custom_call.1} parent=1 // pred_check
      _
    $region15: #{tpu_custom_call.1} parent=1 // pred_check_branch
      %34 = sbr.rel (0) target = $region17
    $region16: #{tpu_custom_call.1} parent=1 // pred_region
      %35 = dma.done [#allocation6], 128
    $region17: #{tpu_custom_call.1} parent=1 // pred_fallthru
      _
    %v36 = vld [vmem:[#allocation2] sm:$0xff]
    %v37 = vlaneseq
    %v38 = vand.u32 %v37, 127
    %v39 = vld [vmem:[#allocation5] sm:$0xff]
    %40 = vset.pattern.permute.xlu0 0
    %41 = vperm.xlu0 %40, %v39
    %v42 = vpop.permute.xlu0 %41
    %vm43 = vcmp.eq.s32.totalorder %v38, %v42
    %44 = vset.pattern.permute.xlu0 1
    %45 = vperm.xlu0 %44, %v39
    %v46 = vpop.permute.xlu0 %45
    %vm47 = vcmp.eq.s32.totalorder %v38, %v46
    %vm48 = vmor %vm43, %vm47
    %49 = vset.pattern.permute.xlu0 2
    %50 = vperm.xlu0 %49, %v39
    %v51 = vpop.permute.xlu0 %50
    %vm52 = vcmp.eq.s32.totalorder %v38, %v51
    %vm53 = vmor %vm48, %vm52
    %54 = vset.pattern.permute.xlu0 3
    %55 = vperm.xlu0 %54, %v39
    %v56 = vpop.permute.xlu0 %55
    %vm57 = vcmp.eq.s32.totalorder %v38, %v56
    %vm58 = vmor %vm53, %vm57
    %59 = vset.pattern.permute.xlu0 4
    %60 = vperm.xlu0 %59, %v39
    %v61 = vpop.permute.xlu0 %60
    %vm62 = vcmp.eq.s32.totalorder %v38, %v61
    %vm63 = vmor %vm58, %vm62
    %64 = vset.pattern.permute.xlu0 5
    %65 = vperm.xlu0 %64, %v39
    %v66 = vpop.permute.xlu0 %65
    %vm67 = vcmp.eq.s32.totalorder %v38, %v66
    %vm68 = vmor %vm63, %vm67
    %69 = vset.pattern.permute.xlu0 6
    %70 = vperm.xlu0 %69, %v39
    %v71 = vpop.permute.xlu0 %70
    %vm72 = vcmp.eq.s32.totalorder %v38, %v71
    %vm73 = vmor %vm68, %vm72
    %74 = vset.pattern.permute.xlu0 7
    %75 = vperm.xlu0 %74, %v39
    %v76 = vpop.permute.xlu0 %75
    %vm77 = vcmp.eq.s32.totalorder %v38, %v76
    %vm78 = vmor %vm73, %vm77
    %v79 = vsub.f32 0.0, %v36
    %v80 = vsel %vm78, %v79, %v36
    %v81 = vand.u32 2147483647, %v80
    %v82 = vsub.f32 0.0, %v81
    %v83 = vmul.f32 %v82, 1.442695
    %v84 = vpow.pop %v83
    %v85 = vadd.f32 %v84, 1.0
    %v86 = vmax.f32 %v80, 0.0
    %v87 = vlog2.pop %v85
    %v88 = vmul.f32 %v87, 0.6931472
    %v89 = vadd.f32 %v86, %v88
    %vm90 = vcmp.ge.f32.partialorder %v80, 0.0
    %v91 = vsel %vm90, 1.0, %v84
    %v92 = vrcp.pop %v85
    %v93 = vmul.f32 %v91, %v92
    %v94 = vmul.f32 %v93, %v93
    %v95 = vsel %vm78, 0.25, 0.75
    %v96 = vmul.f32 %v95, %v94
    %v97 = vmul.f32 %v96, %v89
    %v98 = vrot.slane %v97, 4
    %v99 = vadd.f32 %v97, %v98
    %v100 = vrot.slane %v99, 2
    %v101 = vadd.f32 %v99, %v100
    %v102 = vrot.slane %v101, 1
    %v103 = vadd.f32 %v101, %v102
    %104 = vst [vmem:[#allocation7] sm:$0x1] %v103
    // Predicated region
    $region18: #{tpu_custom_call.1} parent=1 // pred_check
      _
    $region19: #{tpu_custom_call.1} parent=1 // pred_check_branch
      %106 = sbr.rel (0) target = $region21
    $region20: #{tpu_custom_call.1} parent=1 // pred_region
      %s108 = ssub.s32 16, 16
      %109 = vsyncadd [#allocation4], %s108
      %s111 = sshll.u32 [#allocation7], 4
      %s112 = int_to_ptr.vmem [resolvable:$true] %s111
      %114 = dma.vmem_to_hbm [thread:$0]  %s112, 16, %s2, [#allocation4]
    $region21: #{tpu_custom_call.1} parent=1 // pred_fallthru
      _
    // Predicated region
    $region22: #{tpu_custom_call.1} parent=1 // pred_check
      _
    $region23: #{tpu_custom_call.1} parent=1 // pred_check_branch
      %116 = sbr.rel (0) target = $region25
    $region24: #{tpu_custom_call.1} parent=1 // pred_region
      %117 = dma.done [#allocation4], 16
    $region25: #{tpu_custom_call.1} parent=1 // pred_fallthru
      _
    %118 = vsyncpa [#allocation3], 1
    %119 = vsyncpa [#allocation6], 1
    %120 = vsyncpa [#allocation4], 1

</llo_original>
